<compile_context>
chip_gen: v7x
topology: tpu7x:2x2x1
jax: 0.10.0
libtpu: 0.0.40
codegen_flags: <defaults>
</compile_context>

<pallas_src>
import functools

import jax
import jax.numpy as jnp
import numpy as np
from jax.experimental import pallas as pl
from jax.experimental.pallas import tpu as pltpu


# ------------------------------- kernel --------------------------------------

def _seq_loss_kernel(logits_ref, tgt_ref, kl_ref, cnt_ref, kl0_ref, cnt0_ref,
                     kl_acc, cnt_acc, *, confidence, smoothing, const_row,
                     smooth_logsmooth, ignore_index, col_ignore, vocab):
    c = pl.program_id(0)          # TensorCore split axis ("parallel")
    i = pl.program_id(1)          # reduction axis over row tiles ("arbitrary")

    @pl.when(i == 0)
    def _():
        kl_acc[...] = jnp.zeros_like(kl_acc)
        cnt_acc[...] = jnp.zeros_like(cnt_acc)

    x = logits_ref[...].astype(jnp.float32)          # (TN, V)
    tgt = tgt_ref[...]                               # (TN, 1) int32
    tn, v = x.shape

    # rows whose target equals ignore_index (incl. padded tail / phantom rows)
    # contribute nothing; select (not multiply) blocks NaN/garbage leakage.
    row_valid = tgt != ignore_index                  # (TN, 1)

    # numerically stable log-sum-exp over the vocab axis
    m = jnp.max(x, axis=-1, keepdims=True)
    se = jnp.sum(jnp.exp(x - m), axis=-1, keepdims=True)
    lse = m + jnp.log(se)                            # (TN, 1)

    # log p[target] via a one-hot mask-and-sum (no gather needed)
    cols = jax.lax.broadcasted_iota(jnp.int32, (tn, v), 1)
    is_tgt = cols == tgt
    x_tgt = jnp.sum(jnp.where(is_tgt, x, 0.0), axis=-1, keepdims=True)
    logp_tgt = x_tgt - lse

    # base per-row loss; const_row = conf*log(conf) + (V-2)*smooth*log(smooth)
    row_loss = const_row - confidence * logp_tgt

    if smoothing > 0.0:
        sum_x = jnp.sum(x, axis=-1, keepdims=True)
        x_ci = jnp.sum(jnp.where(cols == col_ignore, x, 0.0), axis=-1,
                       keepdims=True)
        logp_ci = x_ci - lse
        row_sum_logp = sum_x - float(vocab) * lse
        row_loss = row_loss - smoothing * (row_sum_logp - logp_tgt - logp_ci)
        # Edge case (negative ignore_index): a legitimate target equal to the
        # ignore *column* keeps the confidence weight (torch scatter-after-zero
        # order), so re-add the smoothing term that the base formula dropped.
        row_loss = row_loss + jnp.where(
            tgt == col_ignore, smooth_logsmooth - smoothing * logp_ci, 0.0)

    row_loss = jnp.where(row_valid, row_loss, 0.0)
    row_cnt = row_valid.astype(jnp.float32)

    # deferred reduction: cheap elementwise (TN,1) adds every step
    kl_acc[...] = kl_acc[...] + row_loss
    cnt_acc[...] = cnt_acc[...] + row_cnt

    # punish_first: capture global row 0 (core 0, tile 0, row 0)
    @pl.when(jnp.logical_and(c == 0, i == 0))
    def _():
        kl0_ref[...] = row_loss[0:1, 0:1].reshape(1, 1, 1)
        cnt0_ref[...] = row_cnt[0:1, 0:1].reshape(1, 1, 1)

    # finalize: one cross-row reduce + scalar store per core
    @pl.when(i == pl.num_programs(1) - 1)
    def _():
        kl_ref[...] = jnp.sum(kl_acc[...], keepdims=True).reshape(1, 1, 1)
        cnt_ref[...] = jnp.sum(cnt_acc[...], keepdims=True).reshape(1, 1, 1)


# ------------------------------ wrapper ---------------------------------------

def _vmem_limit_bytes():
    """Generation-aware VMEM limit: ~96 MiB on v5e/v6e (128 MiB physical),
    ~48 MiB on v7x (64 MiB per TensorCore)."""
    try:
        cap = int(pltpu.get_tpu_info().vmem_capacity_bytes)
    except Exception:
        cap = 64 * 1024 * 1024
    return max(32 * 1024 * 1024, min(cap * 3 // 4, 96 * 1024 * 1024))


def _pick_tile_n(n_rows, v, itemsize, vmem_limit):
    """Largest row tile whose double-buffered input + f32 working set + target /
    scratch buffers fit in roughly half the VMEM limit; rounded to the dtype
    sublane packing (8 f32 / 16 bf16 / 32 int8-fp8 rows)."""
    pack = 8 * max(1, 4 // max(1, itemsize))
    budget = max(vmem_limit // 2, 4 * 1024 * 1024)
    # 2x input double-buffer + ~3 full-tile f32 temporaries per row of V,
    # + lane-padded (128-wide) target double-buffer and two f32 scratch rows.
    per_row = v * (2 * itemsize + 12) + 4 * 128 * 4
    t = int(budget // per_row)
    t = max(pack, min(8192, (t // pack) * pack))
    if n_rows >= 8:
        t = min(t, max(8, (n_rows // 8) * 8))
    else:
        t = 8
    return t


def _loss_sums(logits, tgt, *, confidence, smoothing, ignore_index, col_ignore,
               tile_n=None):
    """Returns (kl_sum, valid_count, kl_row0, valid_row0) with one pallas_call."""
    n, v = logits.shape
    itemsize = jnp.dtype(logits.dtype).itemsize
    vmem_limit = _vmem_limit_bytes()
    if tile_n is None:
        tile_n = _pick_tile_n(n, v, itemsize, vmem_limit)

    # Only when n < 8 do we pad the logits rows (7 rows at most); otherwise the
    # tail tile is partial and masked in-kernel via the padded targets.
    if n < 8:
        logits_in = jnp.pad(logits, ((0, 8 - n), (0, 0)))
        n_arr = 8
    else:
        logits_in = logits
        n_arr = n

    nblocks = pl.cdiv(n_arr, tile_n)
    ncores = 2 if nblocks >= 2 else 1           # 2-TC split (no-op on 1-TC chips)
    tpc = pl.cdiv(nblocks, ncores)              # tiles per core
    last_block = nblocks - 1

    n_tgt = ncores * tpc * tile_n
    tgt2 = tgt.astype(jnp.int32)
    if n_tgt != n:
        # padded / phantom rows get target == ignore_index -> zero contribution
        tgt2 = jnp.pad(tgt2, ((0, n_tgt - n),), constant_values=ignore_index)
    tgt2 = tgt2.reshape(n_tgt, 1)

    conf_logconf = float(confidence * np.log(confidence)) if confidence > 0.0 else 0.0
    smooth_logsmooth = float(smoothing * np.log(smoothing)) if smoothing > 0.0 else 0.0
    const_row = conf_logconf + (v - 2) * smooth_logsmooth

    kernel = functools.partial(
        _seq_loss_kernel,
        confidence=float(confidence), smoothing=float(smoothing),
        const_row=float(const_row), smooth_logsmooth=float(smooth_logsmooth),
        ignore_index=int(ignore_index), col_ignore=int(col_ignore), vocab=int(v))

    scalar_shape = jax.ShapeDtypeStruct((ncores, 1, 1), jnp.float32)
    scalar_spec = pl.BlockSpec((1, 1, 1), lambda c, i: (c, 0, 0))

    kl, cnt, kl0, cnt0 = pl.pallas_call(
        kernel,
        out_shape=(scalar_shape, scalar_shape, scalar_shape, scalar_shape),
        grid_spec=pltpu.PrefetchScalarGridSpec(
            num_scalar_prefetch=0,
            grid=(ncores, tpc),
            in_specs=[
                # clamp phantom tiles (odd nblocks split across 2 cores) so the
                # logits DMA stays in bounds; their targets are ignore_index.
                pl.BlockSpec(
                    (tile_n, v),
                    lambda c, i: (jnp.minimum(c * tpc + i, last_block), 0)),
                pl.BlockSpec((tile_n, 1), lambda c, i: (c * tpc + i, 0)),
            ],
            out_specs=(scalar_spec, scalar_spec, scalar_spec, scalar_spec),
            scratch_shapes=[pltpu.VMEM((tile_n, 1), jnp.float32),
                            pltpu.VMEM((tile_n, 1), jnp.float32)]),
        compiler_params=pltpu.CompilerParams(
            dimension_semantics=("parallel", "arbitrary"),
            vmem_limit_bytes=vmem_limit),
    )(logits_in, tgt2)

    kl_sum = jnp.sum(kl)              # sum the per-core partials
    cnt_sum = jnp.sum(cnt)
    return kl_sum, cnt_sum, kl0[0, 0, 0], cnt0[0, 0, 0]


class SequenceLoss:
    """JAX/Pallas re-implementation of rxnscribe SequenceLoss.forward."""

    def __init__(self, label_smoothing, vocab_size, ignore_index=-100,
                 ignore_indices=(), punish_first=False):
        if ignore_indices:
            ignore_index = ignore_indices[0]
        self.ignore_index = int(ignore_index)
        self.ignore_indices = tuple(int(i) for i in ignore_indices)
        self.punish_first = bool(punish_first)
        self.vocab_size = int(vocab_size)
        self.label_smoothing = float(label_smoothing)
        if self.label_smoothing > 0.0:
            # LabelSmoothingLoss path (kl_div, reduction='batchmean')
            self.smoothing = self.label_smoothing / (vocab_size - 2)
            self.confidence = 1.0 - self.label_smoothing
        else:
            # CrossEntropyLoss(ignore_index, reduction='mean') path:
            # confidence=1 / smoothing=0 makes the per-row KL equal -log p[tgt].
            self.smoothing = 0.0
            self.confidence = 1.0
        # torch indexes one_hot[ignore_index] (supports negative indices)
        self.col_ignore = self.ignore_index % self.vocab_size

    def __call__(self, output, target):
        b, l, v = output.shape
        logits = output.reshape(-1, v)
        tgt = target.reshape(-1)
        for idx in self.ignore_indices:
            if idx != self.ignore_index:
                tgt = jnp.where(tgt == idx, self.ignore_index, tgt)
        kl_sum, cnt, kl0, cnt0 = _loss_sums(
            logits, tgt,
            confidence=self.confidence, smoothing=self.smoothing,
            ignore_index=self.ignore_index, col_ignore=self.col_ignore)
        if self.label_smoothing > 0.0:
            loss = kl_sum / logits.shape[0]      # batchmean over all rows
            loss_first = kl0                     # batchmean over the single row
        else:
            # NOTE: like torch, NaN/Inf if every row is ignored.
            loss = kl_sum / cnt                  # CE mean over non-ignored rows
            loss_first = kl0 / cnt0
        if self.punish_first:
            loss = 10.0 * loss_first + loss
        return loss


# ------------------------- pure-JAX references -------------------------------

def _ref_label_smoothing(logits, tgt, label_smoothing, vocab, ignore_index):
    log_probs = jax.nn.log_softmax(logits.astype(jnp.float32), axis=-1)
    smoothing = label_smoothing / (vocab - 2)
    confidence = 1.0 - label_smoothing
    cols = jnp.arange(vocab)[None, :]
    col_ignore = ignore_index % vocab
    is_tgt = cols == tgt[:, None]
    q = jnp.where(is_tgt, confidence, smoothing)
    q = jnp.where((cols == col_ignore) & (~is_tgt), 0.0, q)
    q = jnp.where((tgt == ignore_index)[:, None], 0.0, q)
    kl = jnp.where(q > 0, q * (jnp.log(jnp.maximum(q, 1e-30)) - log_probs), 0.0)
    return jnp.sum(kl) / logits.shape[0]


def _ref_cross_entropy(logits, tgt, ignore_index):
    log_probs = jax.nn.log_softmax(logits.astype(jnp.float32), axis=-1)
    valid = tgt != ignore_index
    safe_t = jnp.where(valid, tgt, 0)
    nll = -jnp.take_along_axis(log_probs, safe_t[:, None], axis=-1)[:, 0]
    return jnp.sum(jnp.where(valid, nll, 0.0)) / jnp.sum(valid.astype(jnp.float32))


def _ref_sequence_loss(output, target, *, label_smoothing, vocab_size,
                       ignore_index=-100, ignore_indices=(), punish_first=False):
    """Mirrors the torch SequenceLoss.forward semantics exactly."""
    if ignore_indices:
        ignore_index = ignore_indices[0]
    b, l, v = output.shape
    logits = output.reshape(-1, v)
    tgt = target.reshape(-1)
    for idx in ignore_indices:
        if idx != ignore_index:
            tgt = jnp.where(tgt == idx, ignore_index, tgt)
    if label_smoothing == 0:
        crit = lambda lg, t: _ref_cross_entropy(lg, t, ignore_index)
    else:
        crit = lambda lg, t: _ref_label_smoothing(lg, t, label_smoothing, v,
                                                  ignore_index)
    loss = crit(logits, tgt)
    if punish_first:
        loss = 10.0 * crit(logits[:1], tgt[:1]) + loss
    return loss


# ----------------------------------- main ------------------------------------

if __name__ == "__main__":
    B, L, V = 2, 8, 128
    key = jax.random.PRNGKey(0)
    k1, k2 = jax.random.split(key)
    output = jax.random.normal(k1, (B, L, V), dtype=jnp.float32)
    target = jax.random.randint(k2, (B, L), 0, V, dtype=jnp.int32)
    # sprinkle a few pad / ignored tokens
    target = target.at[0, 0].set(0).at[1, 3].set(0).at[1, 7].set(5)

    def _check(got, want, tag):
        got, want = np.asarray(got), np.asarray(want)
        assert np.allclose(got, want, rtol=2e-4, atol=1e-4), (tag, float(got), float(want))

    # 1) label-smoothing path with ignore_indices (effective ignore_index = 5)
    loss = SequenceLoss(0.1, V, ignore_index=0, ignore_indices=[5])(output, target)
    jax.block_until_ready(loss)
    _check(loss, _ref_sequence_loss(output, target, label_smoothing=0.1,
                                    vocab_size=V, ignore_index=0,
                                    ignore_indices=(5,)), "smooth+ignore_indices")

    # 2) label_smoothing == 0 path (CrossEntropyLoss, mean over non-ignored)
    loss_ce = SequenceLoss(0.0, V, ignore_index=0)(output, target)
    jax.block_until_ready(loss_ce)
    _check(loss_ce, _ref_sequence_loss(output, target, label_smoothing=0.0,
                                       vocab_size=V, ignore_index=0), "ce")

    # 3) punish_first path (folded into the same kernel launch)
    loss_pf = SequenceLoss(0.1, V, ignore_index=0, punish_first=True)(output, target)
    jax.block_until_ready(loss_pf)
    _check(loss_pf, _ref_sequence_loss(output, target, label_smoothing=0.1,
                                       vocab_size=V, ignore_index=0,
                                       punish_first=True), "punish_first")

    # 4) negative ignore_index; a target hitting col_ignore = -100 % V = 28
    target_neg = target.at[0, 2].set((-100) % V)
    loss_neg = SequenceLoss(0.1, V, ignore_index=-100)(output, target_neg)
    jax.block_until_ready(loss_neg)
    _check(loss_neg, _ref_sequence_loss(output, target_neg, label_smoothing=0.1,
                                        vocab_size=V, ignore_index=-100),
           "neg_ignore_index")

    # 5) bf16 logits (native-dtype DMA, in-kernel f32 cast)
    out_bf16 = output.astype(jnp.bfloat16)
    loss_bf = SequenceLoss(0.1, V, ignore_index=0)(out_bf16, target)
    jax.block_until_ready(loss_bf)
    _check(loss_bf, _ref_sequence_loss(out_bf16, target, label_smoothing=0.1,
                                       vocab_size=V, ignore_index=0), "bf16")

    # 6) multi-tile + 2-core split + partial tail + phantom (clamped) tile:
    #    40 rows at a forced 8-row tile -> 5 real blocks over a (2,3) grid.
    B2, L2 = 5, 8
    k3, k4 = jax.random.split(k2)
    out2 = jax.random.normal(k3, (B2, L2, V), dtype=jnp.float32)
    tgt2 = jax.random.randint(k4, (B2, L2), 0, V, dtype=jnp.int32)
    tgt2 = tgt2.at[0, 0].set(0).at[3, 5].set(0)
    kl_s, cnt_s, _, _ = _loss_sums(out2.reshape(-1, V), tgt2.reshape(-1),
                                   confidence=0.9, smoothing=0.1 / (V - 2),
                                   ignore_index=0, col_ignore=0, tile_n=8)
    jax.block_until_ready(kl_s)
    _check(kl_s / (B2 * L2),
           _ref_label_smoothing(out2.reshape(-1, V), tgt2.reshape(-1), 0.1, V, 0),
           "forced_small_tile")
    assert int(np.asarray(cnt_s)) == int(np.sum(np.asarray(tgt2) != 0)), "count"

    print("KERNEL_OK")
</pallas_src>

<mosaic_0001>
module attributes {stable_mosaic.version = 11 : i64} {
  func.func @_seq_loss_kernel(%arg0: i32, %arg1: i32, %arg2: memref<16x128xf32, #tpu.memory_space<vmem>>, %arg3: memref<16x1xi32, #tpu.memory_space<vmem>>, %arg4: memref<1x1x1xf32, #tpu.memory_space<vmem>>, %arg5: memref<1x1x1xf32, #tpu.memory_space<vmem>>, %arg6: memref<1x1x1xf32, #tpu.memory_space<vmem>>, %arg7: memref<1x1x1xf32, #tpu.memory_space<vmem>>, %arg8: memref<16x1xf32, #tpu.memory_space<vmem>>, %arg9: memref<16x1xf32, #tpu.memory_space<vmem>>) attributes {dimension_semantics = [#tpu.dimension_semantics<parallel>, #tpu.dimension_semantics<arbitrary>], iteration_bounds = array<i64: 1, 1>, scalar_prefetch = 0 : i64, scratch_operands = 2 : i64, tpu.core_type = #tpu.core_type<tc>, window_params = [{transform_indices = @transform_0, window_bounds = array<i64: 16, 128>}, {transform_indices = @transform_1, window_bounds = array<i64: 16, 1>}, {transform_indices = @transform_2, window_bounds = array<i64: 1, 1, 1>}, {transform_indices = @transform_3, window_bounds = array<i64: 1, 1, 1>}, {transform_indices = @transform_4, window_bounds = array<i64: 1, 1, 1>}, {transform_indices = @transform_5, window_bounds = array<i64: 1, 1, 1>}]} {
    %c0_i32 = arith.constant 0 : i32
    %0 = arith.cmpi eq, %arg1, %c0_i32 : i32
    %1 = arith.extui %0 : i1 to i32
    %c0_i32_0 = arith.constant 0 : i32
    %2 = arith.cmpi ne, %1, %c0_i32_0 : i32
    scf.if %2 {
      %cst_33 = arith.constant 0.000000e+00 : f32
      %72 = vector.broadcast %cst_33 : f32 to vector<16x1xf32>
      %c0_34 = arith.constant 0 : index
      %c0_35 = arith.constant 0 : index
      %73 = vector.load %arg8[%c0_34, %c0_35] : memref<16x1xf32, #tpu.memory_space<vmem>>, vector<16x1xf32>
      tpu.vector_store %arg8[%c0_34, %c0_35], %72 {strides = array<i32>} : memref<16x1xf32, #tpu.memory_space<vmem>>, vector<16x1xf32>,
      %cst_36 = arith.constant 0.000000e+00 : f32
      %74 = vector.broadcast %cst_36 : f32 to vector<16x1xf32>
      %c0_37 = arith.constant 0 : index
      %c0_38 = arith.constant 0 : index
      %75 = vector.load %arg9[%c0_37, %c0_38] : memref<16x1xf32, #tpu.memory_space<vmem>>, vector<16x1xf32>
      tpu.vector_store %arg9[%c0_37, %c0_38], %74 {strides = array<i32>} : memref<16x1xf32, #tpu.memory_space<vmem>>, vector<16x1xf32>,
    } else {
    }
    %c0 = arith.constant 0 : index
    %c0_1 = arith.constant 0 : index
    %3 = vector.load %arg2[%c0, %c0_1] : memref<16x128xf32, #tpu.memory_space<vmem>>, vector<16x128xf32>
    %c0_2 = arith.constant 0 : index
    %c0_3 = arith.constant 0 : index
    %4 = vector.load %arg3[%c0_2, %c0_3] : memref<16x1xi32, #tpu.memory_space<vmem>>, vector<16x1xi32>
    %c5_i32 = arith.constant 5 : i32
    %5 = vector.broadcast %c5_i32 : i32 to vector<16x1xi32>
    %6 = arith.cmpi ne, %4, %5 : vector<16x1xi32>
    %cst = arith.constant dense<0xFF800000> : vector<16xf32>
    %7 = vector.multi_reduction <maximumf>, %3, %cst [1] : vector<16x128xf32> to vector<16xf32>
    %8 = vector.shape_cast %7 : vector<16xf32> to vector<16x1xf32>
    %9 = vector.broadcast %8 : vector<16x1xf32> to vector<16x128xf32>
    %10 = arith.subf %3, %9 : vector<16x128xf32>
    %11 = math.exp %10 : vector<16x128xf32>
    %cst_4 = arith.constant dense<0.000000e+00> : vector<16xf32>
    %12 = vector.multi_reduction <add>, %11, %cst_4 [1] : vector<16x128xf32> to vector<16xf32>
    %13 = vector.shape_cast %12 : vector<16xf32> to vector<16x1xf32>
    %14 = math.log %13 : vector<16x1xf32>
    %15 = arith.addf %8, %14 : vector<16x1xf32>
    %16 = tpu.iota {dimensions = array<i32: 1>} : vector<16x128xi32>
    %17 = vector.broadcast %4 : vector<16x1xi32> to vector<16x128xi32>
    %18 = arith.cmpi eq, %16, %17 : vector<16x128xi32>
    %cst_5 = arith.constant 0.000000e+00 : f32
    %19 = vector.broadcast %cst_5 : f32 to vector<16x128xf32>
    %20 = arith.select %18, %3, %19 : vector<16x128xi1>, vector<16x128xf32>
    %cst_6 = arith.constant dense<0.000000e+00> : vector<16xf32>
    %21 = vector.multi_reduction <add>, %20, %cst_6 [1] : vector<16x128xf32> to vector<16xf32>
    %22 = vector.shape_cast %21 : vector<16xf32> to vector<16x1xf32>
    %23 = arith.subf %22, %15 : vector<16x1xf32>
    %cst_7 = arith.constant 0.899999976 : f32
    %24 = vector.broadcast %cst_7 : f32 to vector<16x1xf32>
    %25 = arith.mulf %24, %23 : vector<16x1xf32>
    %cst_8 = arith.constant -0.808711171 : f32
    %26 = vector.broadcast %cst_8 : f32 to vector<16x1xf32>
    %27 = arith.subf %26, %25 : vector<16x1xf32>
    %cst_9 = arith.constant dense<0.000000e+00> : vector<16xf32>
    %28 = vector.multi_reduction <add>, %3, %cst_9 [1] : vector<16x128xf32> to vector<16xf32>
    %29 = vector.shape_cast %28 : vector<16xf32> to vector<16x1xf32>
    %c5_i32_10 = arith.constant 5 : i32
    %30 = vector.broadcast %c5_i32_10 : i32 to vector<16x128xi32>
    %31 = arith.cmpi eq, %16, %30 : vector<16x128xi32>
    %cst_11 = arith.constant 0.000000e+00 : f32
    %32 = vector.broadcast %cst_11 : f32 to vector<16x128xf32>
    %33 = arith.select %31, %3, %32 : vector<16x128xi1>, vector<16x128xf32>
    %cst_12 = arith.constant dense<0.000000e+00> : vector<16xf32>
    %34 = vector.multi_reduction <add>, %33, %cst_12 [1] : vector<16x128xf32> to vector<16xf32>
    %35 = vector.shape_cast %34 : vector<16xf32> to vector<16x1xf32>
    %36 = arith.subf %35, %15 : vector<16x1xf32>
    %cst_13 = arith.constant 1.280000e+02 : f32
    %37 = vector.broadcast %cst_13 : f32 to vector<16x1xf32>
    %38 = arith.mulf %37, %15 : vector<16x1xf32>
    %39 = arith.subf %29, %38 : vector<16x1xf32>
    %40 = arith.subf %39, %23 : vector<16x1xf32>
    %41 = arith.subf %40, %36 : vector<16x1xf32>
    %cst_14 = arith.constant 7.93650805E-4 : f32
    %42 = vector.broadcast %cst_14 : f32 to vector<16x1xf32>
    %43 = arith.mulf %42, %41 : vector<16x1xf32>
    %44 = arith.subf %27, %43 : vector<16x1xf32>
    %c5_i32_15 = arith.constant 5 : i32
    %45 = vector.broadcast %c5_i32_15 : i32 to vector<16x1xi32>
    %46 = arith.cmpi eq, %4, %45 : vector<16x1xi32>
    %cst_16 = arith.constant 7.93650805E-4 : f32
    %47 = vector.broadcast %cst_16 : f32 to vector<16x1xf32>
    %48 = arith.mulf %47, %36 : vector<16x1xf32>
    %cst_17 = arith.constant -0.00566576747 : f32
    %49 = vector.broadcast %cst_17 : f32 to vector<16x1xf32>
    %50 = arith.subf %49, %48 : vector<16x1xf32>
    %cst_18 = arith.constant 0.000000e+00 : f32
    %51 = vector.broadcast %cst_18 : f32 to vector<16x1xf32>
    %52 = arith.select %46, %50, %51 : vector<16x1xi1>, vector<16x1xf32>
    %53 = arith.addf %44, %52 : vector<16x1xf32>
    %cst_19 = arith.constant 0.000000e+00 : f32
    %54 = vector.broadcast %cst_19 : f32 to vector<16x1xf32>
    %55 = arith.select %6, %53, %54 : vector<16x1xi1>, vector<16x1xf32>
    %56 = arith.extui %6 : vector<16x1xi1> to vector<16x1xi32>
    %57 = arith.sitofp %56 : vector<16x1xi32> to vector<16x1xf32>
    %c0_20 = arith.constant 0 : index
    %c0_21 = arith.constant 0 : index
    %58 = vector.load %arg8[%c0_20, %c0_21] : memref<16x1xf32, #tpu.memory_space<vmem>>, vector<16x1xf32>
    %59 = arith.addf %58, %55 : vector<16x1xf32>
    %c0_22 = arith.constant 0 : index
    %c0_23 = arith.constant 0 : index
    %60 = vector.load %arg8[%c0_22, %c0_23] : memref<16x1xf32, #tpu.memory_space<vmem>>, vector<16x1xf32>
    tpu.vector_store %arg8[%c0_22, %c0_23], %59 {strides = array<i32>} : memref<16x1xf32, #tpu.memory_space<vmem>>, vector<16x1xf32>,
    %c0_24 = arith.constant 0 : index
    %c0_25 = arith.constant 0 : index
    %61 = vector.load %arg9[%c0_24, %c0_25] : memref<16x1xf32, #tpu.memory_space<vmem>>, vector<16x1xf32>
    %62 = arith.addf %61, %57 : vector<16x1xf32>
    %c0_26 = arith.constant 0 : index
    %c0_27 = arith.constant 0 : index
    %63 = vector.load %arg9[%c0_26, %c0_27] : memref<16x1xf32, #tpu.memory_space<vmem>>, vector<16x1xf32>
    tpu.vector_store %arg9[%c0_26, %c0_27], %62 {strides = array<i32>} : memref<16x1xf32, #tpu.memory_space<vmem>>, vector<16x1xf32>,
    %c0_i32_28 = arith.constant 0 : i32
    %64 = arith.cmpi eq, %arg0, %c0_i32_28 : i32
    %c0_i32_29 = arith.constant 0 : i32
    %65 = arith.cmpi eq, %arg1, %c0_i32_29 : i32
    %66 = arith.andi %64, %65 : i1
    %67 = arith.extui %66 : i1 to i32
    %c0_i32_30 = arith.constant 0 : i32
    %68 = arith.cmpi ne, %67, %c0_i32_30 : i32
    scf.if %68 {
      %72 = vector.extract_strided_slice %55 {offsets = [0, 0], sizes = [1, 1], strides = [1, 1]} : vector<16x1xf32> to vector<1x1xf32>
      %73 = vector.shape_cast %72 : vector<1x1xf32> to vector<1x1x1xf32>
      %c0_33 = arith.constant 0 : index
      %c0_34 = arith.constant 0 : index
      %c0_35 = arith.constant 0 : index
      %74 = vector.load %arg6[%c0_33, %c0_34, %c0_35] : memref<1x1x1xf32, #tpu.memory_space<vmem>>, vector<1x1x1xf32>
      tpu.vector_store %arg6[%c0_33, %c0_34, %c0_35], %73 {strides = array<i32>} : memref<1x1x1xf32, #tpu.memory_space<vmem>>, vector<1x1x1xf32>,
      %75 = vector.extract_strided_slice %57 {offsets = [0, 0], sizes = [1, 1], strides = [1, 1]} : vector<16x1xf32> to vector<1x1xf32>
      %76 = vector.shape_cast %75 : vector<1x1xf32> to vector<1x1x1xf32>
      %c0_36 = arith.constant 0 : index
      %c0_37 = arith.constant 0 : index
      %c0_38 = arith.constant 0 : index
      %77 = vector.load %arg7[%c0_36, %c0_37, %c0_38] : memref<1x1x1xf32, #tpu.memory_space<vmem>>, vector<1x1x1xf32>
      tpu.vector_store %arg7[%c0_36, %c0_37, %c0_38], %76 {strides = array<i32>} : memref<1x1x1xf32, #tpu.memory_space<vmem>>, vector<1x1x1xf32>,
    } else {
    }
    %c0_i32_31 = arith.constant 0 : i32
    %69 = arith.cmpi eq, %arg1, %c0_i32_31 : i32
    %70 = arith.extui %69 : i1 to i32
    %c0_i32_32 = arith.constant 0 : i32
    %71 = arith.cmpi ne, %70, %c0_i32_32 : i32
    scf.if %71 {
      %c0_33 = arith.constant 0 : index
      %c0_34 = arith.constant 0 : index
      %72 = vector.load %arg8[%c0_33, %c0_34] : memref<16x1xf32, #tpu.memory_space<vmem>>, vector<16x1xf32>
      %73 = vector.shape_cast %72 : vector<16x1xf32> to vector<1x16x1xf32>
      %cst_35 = arith.constant dense<0.000000e+00> : vector<1xf32>
      %74 = vector.multi_reduction <add>, %73, %cst_35 [1, 2] : vector<1x16x1xf32> to vector<1xf32>
      %75 = vector.shape_cast %74 : vector<1xf32> to vector<1x1x1xf32>
      %76 = vector.extract %75[0, 0, 0] : f32 from vector<1x1x1xf32>
      %77 = vector.broadcast %76 : f32 to vector<1x1xf32>
      %78 = vector.shape_cast %77 : vector<1x1xf32> to vector<1x1x1xf32>
      %c0_36 = arith.constant 0 : index
      %c0_37 = arith.constant 0 : index
      %c0_38 = arith.constant 0 : index
      %79 = vector.load %arg4[%c0_36, %c0_37, %c0_38] : memref<1x1x1xf32, #tpu.memory_space<vmem>>, vector<1x1x1xf32>
      tpu.vector_store %arg4[%c0_36, %c0_37, %c0_38], %78 {strides = array<i32>} : memref<1x1x1xf32, #tpu.memory_space<vmem>>, vector<1x1x1xf32>,
      %c0_39 = arith.constant 0 : index
      %c0_40 = arith.constant 0 : index
      %80 = vector.load %arg9[%c0_39, %c0_40] : memref<16x1xf32, #tpu.memory_space<vmem>>, vector<16x1xf32>
      %81 = vector.shape_cast %80 : vector<16x1xf32> to vector<1x16x1xf32>
      %cst_41 = arith.constant dense<0.000000e+00> : vector<1xf32>
      %82 = vector.multi_reduction <add>, %81, %cst_41 [1, 2] : vector<1x16x1xf32> to vector<1xf32>
      %83 = vector.shape_cast %82 : vector<1xf32> to vector<1x1x1xf32>
      %84 = vector.extract %83[0, 0, 0] : f32 from vector<1x1x1xf32>
      %85 = vector.broadcast %84 : f32 to vector<1x1xf32>
      %86 = vector.shape_cast %85 : vector<1x1xf32> to vector<1x1x1xf32>
      %c0_42 = arith.constant 0 : index
      %c0_43 = arith.constant 0 : index
      %c0_44 = arith.constant 0 : index
      %87 = vector.load %arg5[%c0_42, %c0_43, %c0_44] : memref<1x1x1xf32, #tpu.memory_space<vmem>>, vector<1x1x1xf32>
      tpu.vector_store %arg5[%c0_42, %c0_43, %c0_44], %86 {strides = array<i32>} : memref<1x1x1xf32, #tpu.memory_space<vmem>>, vector<1x1x1xf32>,
    } else {
    }
    return
  }
  func.func @transform_0(%arg0: i32, %arg1: i32) -> (i32, i32) {
    %c1_i32 = arith.constant 1 : i32
    %0 = arith.muli %arg0, %c1_i32 : i32
    %1 = arith.addi %0, %arg1 : i32
    %c0_i32 = arith.constant 0 : i32
    %2 = arith.minsi %1, %c0_i32 : i32
    %c0_i32_0 = arith.constant 0 : i32
    %c0_i32_1 = arith.constant 0 : i32
    return %2, %c0_i32_0 : i32, i32
  }
  func.func @transform_1(%arg0: i32, %arg1: i32) -> (i32, i32) {
    %c1_i32 = arith.constant 1 : i32
    %0 = arith.muli %arg0, %c1_i32 : i32
    %1 = arith.addi %0, %arg1 : i32
    %c0_i32 = arith.constant 0 : i32
    %c0_i32_0 = arith.constant 0 : i32
    return %1, %c0_i32 : i32, i32
  }
  func.func @transform_2(%arg0: i32, %arg1: i32) -> (i32, i32, i32) {
    %c0_i32 = arith.constant 0 : i32
    %c0_i32_0 = arith.constant 0 : i32
    %c0_i32_1 = arith.constant 0 : i32
    return %arg0, %c0_i32, %c0_i32_0 : i32, i32, i32
  }
  func.func @transform_3(%arg0: i32, %arg1: i32) -> (i32, i32, i32) {
    %c0_i32 = arith.constant 0 : i32
    %c0_i32_0 = arith.constant 0 : i32
    %c0_i32_1 = arith.constant 0 : i32
    return %arg0, %c0_i32, %c0_i32_0 : i32, i32, i32
  }
  func.func @transform_4(%arg0: i32, %arg1: i32) -> (i32, i32, i32) {
    %c0_i32 = arith.constant 0 : i32
    %c0_i32_0 = arith.constant 0 : i32
    %c0_i32_1 = arith.constant 0 : i32
    return %arg0, %c0_i32, %c0_i32_0 : i32, i32, i32
  }
  func.func @transform_5(%arg0: i32, %arg1: i32) -> (i32, i32, i32) {
    %c0_i32 = arith.constant 0 : i32
    %c0_i32_0 = arith.constant 0 : i32
    %c0_i32_1 = arith.constant 0 : i32
    return %arg0, %c0_i32, %c0_i32_0 : i32, i32, i32
  }
}

</mosaic_0001>

<llo_original>
// kernel: tpu_custom_call.1
$region0: #{tpu_custom_call.1}
  #allocation0 [shape = 'u32[]', space=smem, size = 0x4, offset = 0x4, fixed_abs, tag = 'smem constant byte address 0x4 - core index']
  #allocation1 [shape = 'u32[144,128]{1,0:T(1,128)}', space=vmem, size = 0x12000, scoped, tag = 'internal scratch']
  #allocation2 [shape = 'f32[16,1]{1,0:T(8,128)}', space=vmem, size = 0x2000, scoped, tag = 'scratch operand']
  #allocation3 [shape = 'f32[16,1]{1,0:T(8,128)}', space=vmem, size = 0x2000, scoped, tag = 'scratch operand']
  %s0 = inlined_call_operand.vmem [shape: f32[16,128], index: 0, kind: input, shape index: {}]
  %s1 = inlined_call_operand.vmem [shape: s32[16,1], index: 1, kind: input, shape index: {}]
  %s2 = inlined_call_operand.hbm [shape: f32[1,1,1], index: 2, kind: output, shape index: {0}]
  %s3 = inlined_call_operand.hbm [shape: f32[1,1,1], index: 3, kind: output, shape index: {1}]
  %s4 = inlined_call_operand.hbm [shape: f32[1,1,1], index: 4, kind: output, shape index: {2}]
  %s5 = inlined_call_operand.hbm [shape: f32[1,1,1], index: 5, kind: output, shape index: {3}]
  %6 = xla_tuple %s2, %s3, %s4, %s5
  %s7 = sld [smem:[#allocation0]]
  $region54: #{tpu_custom_call.1} parent=0
    _
  %s9 = ssub.s32 1, %s7
  %s10 = scalar_select 0, %s9, %s7
  $region1: #{tpu_custom_call.1} parent=0
    #allocation4 [shape = 'u8[512]{0}', space=vmem, size = 0x400, scoped, tag = 'output window, operand 0, single buffered']
    #allocation5 [shape = 's32[1]{0}', space=sflag, size = 0x4, scoped, tag = 'scoped memory for tpu_custom_call.1']
    #allocation6 [shape = 'u8[512]{0}', space=vmem, size = 0x400, scoped, tag = 'output window, operand 1, single buffered']
    #allocation7 [shape = 's32[1]{0}', space=sflag, size = 0x4, scoped, tag = 'scoped memory for tpu_custom_call.1']
    #allocation8 [shape = 'u8[512]{0}', space=vmem, size = 0x400, scoped, tag = 'output window, operand 2, single buffered']
    #allocation9 [shape = 'u8[512]{0}', space=vmem, size = 0x400, scoped, tag = 'output window, operand 3, single buffered']
    #allocation10 [shape = 's32[1]{0}', space=sflag, size = 0x4, scoped, tag = 'scoped memory for tpu_custom_call.1']
    %11 = vsyncpa [#allocation5], 0
    %12 = vsyncpa [#allocation7], 0
    %13 = vsyncpa [#allocation10], 0
    // Predicated region
    $region2: #{tpu_custom_call.1} parent=1 // pred_check
      _
    $region3: #{tpu_custom_call.1} parent=1 // pred_check_branch
      %15 = sbr.rel (0) target = $region5
    $region4: #{tpu_custom_call.1} parent=1 // pred_region
      %s16 = sadd.s32 0, 0
      %p17 = scmp.lt.s32.totalorder %s16, 0
      %s18 = scalar_select %p17, %s16, 0
      %s19 = smul.u32 2, %s18
      %p20 = scmp.lt.s32.totalorder %s19, 1
      %s21 = scalar_select %p20, %s19, 1
      %s22 = smul.addr %s21, 8
      %s23 = scalar_lea.vmem %s0, %s22
      %s24 = sadd.s32 0, 0
      %p25 = scmp.lt.s32.totalorder %s24, 0
      %s26 = scalar_select %p25, %s24, 0
      %s27 = smul.u32 2, %s26
    $region5: #{tpu_custom_call.1} parent=1 // pred_fallthru
      _
    // Predicated region
    $region6: #{tpu_custom_call.1} parent=1 // pred_check
      _
    $region7: #{tpu_custom_call.1} parent=1 // pred_check_branch
      %29 = sbr.rel (0) target = $region9
    $region8: #{tpu_custom_call.1} parent=1 // pred_region
      %s30 = sadd.s32 0, 0
      %s31 = smul.u32 2, %s30
      %p32 = scmp.lt.s32.totalorder %s31, 1
      %s33 = scalar_select %p32, %s31, 1
      %s34 = smul.addr %s33, 8
      %s35 = scalar_lea.vmem %s1, %s34
      %s36 = sadd.s32 0, 0
      %s37 = smul.u32 2, %s36
    $region9: #{tpu_custom_call.1} parent=1 // pred_fallthru
      _
    %s38 = sadd.s32 0, 0
    %p39 = scmp.lt.s32.totalorder %s38, 0
    %s40 = scalar_select %p39, %s38, 0
    %s41 = smul.u32 2, %s40
    %p42 = scmp.lt.s32.totalorder %s41, 1
    %s43 = scalar_select %p42, %s41, 1
    %s44 = smul.addr %s43, 8
    %s45 = scalar_lea.vmem %s0, %s44
    %s46 = sadd.s32 0, 0
    %s47 = smul.u32 2, %s46
    %p48 = scmp.lt.s32.totalorder %s47, 1
    %s49 = scalar_select %p48, %s47, 1
    %s50 = smul.addr %s49, 8
    %s51 = scalar_lea.vmem %s1, %s50
    %s52 = sadd.s32 0, 0
    %p53 = scmp.lt.s32.totalorder %s52, 0
    %s54 = scalar_select %p53, %s52, 0
    %s55 = smul.u32 2, %s54
    %p56 = scmp.lt.s32.totalorder %s55, 1
    %s57 = scalar_select %p56, %s55, 1
    %s58 = smul.addr %s57, 8
    %s59 = scalar_lea.vmem %s0, %s58
    %s60 = sadd.s32 0, 0
    %p61 = scmp.lt.s32.totalorder %s60, 0
    %s62 = scalar_select %p61, %s60, 0
    %s63 = smul.u32 2, %s62
    %s64 = sadd.s32 0, 0
    %s65 = smul.u32 2, %s64
    %p66 = scmp.lt.s32.totalorder %s65, 1
    %s67 = scalar_select %p66, %s65, 1
    %s68 = smul.addr %s67, 8
    %s69 = scalar_lea.vmem %s1, %s68
    %s70 = sadd.s32 0, 0
    %s71 = smul.u32 2, %s70
    %p72 = scmp.eq.s32.totalorder 0, 0
    // Predicated region
    $region10: #{tpu_custom_call.1} parent=1 // pred_check
      %p73 = pneg %p72
    $region11: #{tpu_custom_call.1} parent=1 // pred_check_branch
      %75 = sbr.rel (%p73) target = $region13
    $region12: #{tpu_custom_call.1} parent=1 // pred_region
      %vm76 = vcmask 7168
      %77 = vst.msk [vmem:[#allocation2] sm:$0xff] %vm76, 0.0
      %78 = vst.msk [vmem:[#allocation2 + $0x8] sm:$0xff] %vm76, 0.0
      %79 = vst.msk [vmem:[#allocation3] sm:$0xff] %vm76, 0.0
      %80 = vst.msk [vmem:[#allocation3 + $0x8] sm:$0xff] %vm76, 0.0
    $region13: #{tpu_custom_call.1} parent=1 // pred_fallthru
      _
    %v81 = vld [vmem:[%s59] sm:$0xff]
    %v82 = vld [vmem:[%s59 + $0x8] sm:$0xff]
    %v83 = vld [vmem:[%s69] sm:$0xff]
    %v84 = vld [vmem:[%s69 + $0x8] sm:$0xff]
    %vm85 = vcmp.ne.s32.totalorder %v83, 5
    %vm86 = vcmp.ne.s32.totalorder %v84, 5
    %87 = vmax.xlane.f32.xlu0 %v81
    %v88 = vpop.xlane.xlu0 %87
    %89 = vmax.xlane.f32.xlu0 %v82
    %v90 = vpop.xlane.xlu0 %89
    %v91 = vsub.f32 %v81, %v88
    %v92 = vsub.f32 %v82, %v90
    %v93 = vmul.f32 %v91, 1.442695
    %v94 = vpow.pop %v93
    %v95 = vmul.f32 %v92, 1.442695
    %v96 = vpow.pop %v95
    %97 = vadd.xlane.f32.xlu0 %v94
    %v98 = vpop.xlane.xlu0 %97
    %99 = vadd.xlane.f32.xlu0 %v96
    %v100 = vpop.xlane.xlu0 %99
    %v101 = vlog2.pop %v98
    %v102 = vmul.f32 %v101, 0.6931472
    %v103 = vlog2.pop %v100
    %v104 = vmul.f32 %v103, 0.6931472
    %v105 = vadd.f32 %v88, %v102
    %v106 = vadd.f32 %v90, %v104
    %v107 = vlaneseq
    %v108 = vand.u32 %v107, 127
    %109 = vset.pattern.permute.xlu0 0
    %110 = vperm.xlu0 %109, %v83
    %v111 = vpop.permute.xlu0 %110
    %112 = vset.pattern.permute.xlu0 0
    %113 = vperm.xlu0 %112, %v84
    %v114 = vpop.permute.xlu0 %113
    %vm115 = vcmp.eq.s32.totalorder %v108, %v111
    %vm116 = vcmp.eq.s32.totalorder %v108, %v114
    %v117 = vsel %vm115, %v81, 0.0
    %v118 = vsel %vm116, %v82, 0.0
    %119 = vadd.xlane.f32.xlu0 %v117
    %v120 = vpop.xlane.xlu0 %119
    %121 = vadd.xlane.f32.xlu0 %v118
    %v122 = vpop.xlane.xlu0 %121
    %v123 = vsub.f32 %v120, %v105
    %v124 = vsub.f32 %v122, %v106
    %v125 = vmul.f32 %v123, 0.9
    %v126 = vmul.f32 %v124, 0.9
    %v127 = vsub.f32 -0.8087112, %v125
    %v128 = vsub.f32 -0.8087112, %v126
    %129 = vadd.xlane.f32.xlu0 %v81
    %v130 = vpop.xlane.xlu0 %129
    %131 = vadd.xlane.f32.xlu0 %v82
    %v132 = vpop.xlane.xlu0 %131
    %vm133 = vcmp.eq.s32.totalorder %v108, 5
    %v134 = vsel %vm133, %v81, 0.0
    %v135 = vsel %vm133, %v82, 0.0
    %136 = vadd.xlane.f32.xlu0 %v134
    %v137 = vpop.xlane.xlu0 %136
    %138 = vadd.xlane.f32.xlu0 %v135
    %v139 = vpop.xlane.xlu0 %138
    %v140 = vsub.f32 %v137, %v105
    %v141 = vsub.f32 %v139, %v106
    %v142 = vmul.f32 %v105, 128.0
    %v143 = vmul.f32 %v106, 128.0
    %v144 = vsub.f32 %v130, %v142
    %v145 = vsub.f32 %v132, %v143
    %v146 = vsub.f32 %v144, %v123
    %v147 = vsub.f32 %v145, %v124
    %v148 = vsub.f32 %v146, %v140
    %v149 = vsub.f32 %v147, %v141
    %v150 = vmul.f32 %v148, 0.0007936508
    %v151 = vmul.f32 %v149, 0.0007936508
    %v152 = vsub.f32 %v127, %v150
    %v153 = vsub.f32 %v128, %v151
    %vm154 = vcmp.eq.s32.totalorder %v83, 5
    %vm155 = vcmp.eq.s32.totalorder %v84, 5
    %v156 = vmul.f32 %v140, 0.0007936508
    %v157 = vmul.f32 %v141, 0.0007936508
    %v158 = vsub.f32 -0.0056657675, %v156
    %v159 = vsub.f32 -0.0056657675, %v157
    %v160 = vsel %vm154, %v158, 0.0
    %v161 = vsel %vm155, %v159, 0.0
    %v162 = vadd.f32 %v152, %v160
    %v163 = vadd.f32 %v153, %v161
    %v164 = vsel %vm85, %v162, 0.0
    %v165 = vsel %vm86, %v163, 0.0
    %v166 = vsel %vm85, 1, 0
    %v167 = vsel %vm86, 1, 0
    %v168 = vcvt.s32.f32 %v166
    %v169 = vcvt.s32.f32 %v167
    %v170 = vld [vmem:[#allocation2] sm:$0xff]
    %v171 = vld [vmem:[#allocation2 + $0x8] sm:$0xff]
    %v172 = vadd.f32 %v170, %v164
    %v173 = vadd.f32 %v171, %v165
    %vm174 = vcmask 7168
    %175 = vst.msk [vmem:[#allocation2] sm:$0xff] %vm174, %v172
    %176 = vst.msk [vmem:[#allocation2 + $0x8] sm:$0xff] %vm174, %v173
    %v177 = vld [vmem:[#allocation3] sm:$0xff]
    %v178 = vld [vmem:[#allocation3 + $0x8] sm:$0xff]
    %v179 = vadd.f32 %v177, %v168
    %v180 = vadd.f32 %v178, %v169
    %181 = vst.msk [vmem:[#allocation3] sm:$0xff] %vm174, %v179
    %182 = vst.msk [vmem:[#allocation3 + $0x8] sm:$0xff] %vm174, %v180
    %p183 = scmp.eq.s32.totalorder 0, 0
    %p184 = pnand %p183, %p72
    %p185 = pneg %p184
    // Predicated region
    $region14: #{tpu_custom_call.1} parent=1 // pred_check
      _
    $region15: #{tpu_custom_call.1} parent=1 // pred_check_branch
      %187 = sbr.rel (%p184) target = $region17
    $region16: #{tpu_custom_call.1} parent=1 // pred_region
      %vm188 = vcmask 0
      %189 = vst.msk [vmem:[#allocation8] sm:$0x1] %vm188, %v164
      %190 = vst.msk [vmem:[#allocation9] sm:$0x1] %vm188, %v168
    $region17: #{tpu_custom_call.1} parent=1 // pred_fallthru
      _
    // Predicated region
    $region18: #{tpu_custom_call.1} parent=1 // pred_check
      %p191 = pneg %p72
    $region19: #{tpu_custom_call.1} parent=1 // pred_check_branch
      %193 = sbr.rel (%p191) target = $region21
    $region20: #{tpu_custom_call.1} parent=1 // pred_region
      %v194 = vld [vmem:[#allocation2] sm:$0xff]
      %v195 = vld [vmem:[#allocation2 + $0x8] sm:$0xff]
      %v196 = vsel %vm174, %v194, 0.0
      %v197 = vsel %vm174, %v195, 0.0
      %v198 = vadd.f32 %v196, %v197
      %199 = vadd.xlane.f32.xlu0 %v198
      %v200 = vpop.xlane.xlu0 %199
      %v201 = vrot.slane %v200, 4
      %v202 = vadd.f32 %v200, %v201
      %v203 = vrot.slane %v202, 2
      %v204 = vadd.f32 %v202, %v203
      %v205 = vrot.slane %v204, 1
      %v206 = vadd.f32 %v204, %v205
      %s207 = vtos %v206
      %v208 = vstv %s207
      %vm209 = vcmask 0
      %210 = vst.msk [vmem:[#allocation4] sm:$0x1] %vm209, %v208
      %v211 = vld [vmem:[#allocation3] sm:$0xff]
      %v212 = vld [vmem:[#allocation3 + $0x8] sm:$0xff]
      %v213 = vsel %vm174, %v211, 0.0
      %v214 = vsel %vm174, %v212, 0.0
      %v215 = vadd.f32 %v213, %v214
      %216 = vadd.xlane.f32.xlu0 %v215
      %v217 = vpop.xlane.xlu0 %216
      %v218 = vrot.slane %v217, 4
      %v219 = vadd.f32 %v217, %v218
      %v220 = vrot.slane %v219, 2
      %v221 = vadd.f32 %v219, %v220
      %v222 = vrot.slane %v221, 1
      %v223 = vadd.f32 %v221, %v222
      %s224 = vtos %v223
      %v225 = vstv %s224
      %226 = vst.msk [vmem:[#allocation6] sm:$0x1] %vm209, %v225
    $region21: #{tpu_custom_call.1} parent=1 // pred_fallthru
      _
    // Predicated region
    $region22: #{tpu_custom_call.1} parent=1 // pred_check
      _
    $region23: #{tpu_custom_call.1} parent=1 // pred_check_branch
      %228 = sbr.rel (0) target = $region25
    $region24: #{tpu_custom_call.1} parent=1 // pred_region
      %s230 = ssub.s32 16, 16
      %231 = vsyncadd [#allocation5], %s230
      %s233 = sshll.u32 [#allocation4], 4
      %s234 = int_to_ptr.vmem [resolvable:$true] %s233
      %236 = dma.vmem_to_hbm [thread:$0]  %s234, 16, %s2, [#allocation5]
    $region25: #{tpu_custom_call.1} parent=1 // pred_fallthru
      _
    // Predicated region
    $region26: #{tpu_custom_call.1} parent=1 // pred_check
      _
    $region27: #{tpu_custom_call.1} parent=1 // pred_check_branch
      %238 = sbr.rel (0) target = $region29
    $region28: #{tpu_custom_call.1} parent=1 // pred_region
      %s240 = ssub.s32 16, 16
      %241 = vsyncadd [#allocation7], %s240
      %s243 = sshll.u32 [#allocation6], 4
      %s244 = int_to_ptr.vmem [resolvable:$true] %s243
      %246 = dma.vmem_to_hbm [thread:$0]  %s244, 16, %s3, [#allocation7]
    $region29: #{tpu_custom_call.1} parent=1 // pred_fallthru
      _
    // Predicated region
    $region30: #{tpu_custom_call.1} parent=1 // pred_check
      _
    $region31: #{tpu_custom_call.1} parent=1 // pred_check_branch
      %248 = sbr.rel (0) target = $region33
    $region32: #{tpu_custom_call.1} parent=1 // pred_region
      %s250 = ssub.s32 16, 16
      %251 = vsyncadd [#allocation7], %s250
      %s253 = sshll.u32 [#allocation8], 4
      %s254 = int_to_ptr.vmem [resolvable:$true] %s253
      %256 = dma.vmem_to_hbm [thread:$0]  %s254, 16, %s4, [#allocation7]
    $region33: #{tpu_custom_call.1} parent=1 // pred_fallthru
      _
    // Predicated region
    $region34: #{tpu_custom_call.1} parent=1 // pred_check
      _
    $region35: #{tpu_custom_call.1} parent=1 // pred_check_branch
      %258 = sbr.rel (0) target = $region37
    $region36: #{tpu_custom_call.1} parent=1 // pred_region
      %s260 = ssub.s32 16, 16
      %261 = vsyncadd [#allocation10], %s260
      %s263 = sshll.u32 [#allocation9], 4
      %s264 = int_to_ptr.vmem [resolvable:$true] %s263
      %266 = dma.vmem_to_hbm [thread:$0]  %s264, 16, %s5, [#allocation10]
    $region37: #{tpu_custom_call.1} parent=1 // pred_fallthru
      _
    // Predicated region
    $region38: #{tpu_custom_call.1} parent=1 // pred_check
      _
    $region39: #{tpu_custom_call.1} parent=1 // pred_check_branch
      %268 = sbr.rel (0) target = $region41
    $region40: #{tpu_custom_call.1} parent=1 // pred_region
      %269 = dma.done [#allocation5], 16
    $region41: #{tpu_custom_call.1} parent=1 // pred_fallthru
      _
    // Predicated region
    $region42: #{tpu_custom_call.1} parent=1 // pred_check
      _
    $region43: #{tpu_custom_call.1} parent=1 // pred_check_branch
      %271 = sbr.rel (0) target = $region45
    $region44: #{tpu_custom_call.1} parent=1 // pred_region
      %272 = dma.done [#allocation7], 16
    $region45: #{tpu_custom_call.1} parent=1 // pred_fallthru
      _
    // Predicated region
    $region46: #{tpu_custom_call.1} parent=1 // pred_check
      _
    $region47: #{tpu_custom_call.1} parent=1 // pred_check_branch
      %274 = sbr.rel (0) target = $region49
    $region48: #{tpu_custom_call.1} parent=1 // pred_region
      %275 = dma.done [#allocation7], 16
    $region49: #{tpu_custom_call.1} parent=1 // pred_fallthru
      _
    // Predicated region
    $region50: #{tpu_custom_call.1} parent=1 // pred_check
      _
    $region51: #{tpu_custom_call.1} parent=1 // pred_check_branch
      %277 = sbr.rel (0) target = $region53
    $region52: #{tpu_custom_call.1} parent=1 // pred_region
      %278 = dma.done [#allocation10], 16
    $region53: #{tpu_custom_call.1} parent=1 // pred_fallthru
      _
    %279 = vsyncpa [#allocation5], 1
    %280 = vsyncpa [#allocation7], 1
    %281 = vsyncpa [#allocation10], 1

</llo_original>
